<compile_context>
chip_gen: v7x
topology: tpu7x:2x2x1
jax: 0.10.0
libtpu: 0.0.40
codegen_flags: <defaults>
</compile_context>

<pallas_src>
import jax
import jax.numpy as jnp
from jax.experimental import pallas as pl
from jax.experimental.pallas import tpu as pltpu


def _fuse_kernel(x_ref, w1t_ref, b1_ref, w2_ref, b2_ref, o_ref):
    # x:(E,TN) lanes = B*D tile; w1t:(32,E); b1:(32,1); w2:(32,1); b2:(1,) SMEM.
    x = x_ref[...]                                            # (E, TN)
    h = jnp.dot(w1t_ref[...], x,
                preferred_element_type=jnp.float32)           # MXU: (32, TN)
    h = jnp.maximum(h + b1_ref[...], 0.0)                     # bias bcast over lanes
    # Second linear has output width 1 -> do it as VPU mul + sublane reduction
    # instead of an almost-idle MXU matmul.
    y = jnp.sum(h * w2_ref[...], axis=0, keepdims=True) + b2_ref[0]   # (1, TN)
    o_ref[...] = y + x[18:19, :]                              # residual: embedding 18


def _pick_tile(n, cap=16384):
    """Largest lane-tile that is a multiple of 128, divides n and fits VMEM easily."""
    if n % 128 != 0:
        return n                      # full extent (legal: block dim == array dim)
    tn = (min(n, cap) // 128) * 128
    while n % tn != 0:
        tn -= 128
    return tn


def spacial_embedding_fuse(spacial_embeddings, w1, b1, w2, b2, *, tn=None):
    """spacial_embeddings: (embed_num, B, embed_dim) -> (1, B, embed_dim)."""
    E, B, D = spacial_embeddings.shape
    assert E >= 19, "residual uses embedding index 18; need embed_num >= 19"
    N = B * D

    # Natural row-major collapse of (B, D) -> lanes. No transpose, no data movement.
    x = spacial_embeddings.reshape(E, N)

    w1t = jnp.transpose(w1)           # (32, E) — tiny parameter, one-off
    b1c = b1.reshape(32, 1)
    w2c = w2.reshape(32, 1)
    b2s = b2.reshape(1,)

    if tn is None:
        tn = _pick_tile(N)
    assert N % tn == 0 and (tn % 128 == 0 or tn == N), (N, tn)

    out_flat = pl.pallas_call(
        _fuse_kernel,
        out_shape=jax.ShapeDtypeStruct((1, N), jnp.float32),
        grid_spec=pltpu.PrefetchScalarGridSpec(
            num_scalar_prefetch=0,
            grid=(N // tn,),
            in_specs=[
                pl.BlockSpec((E, tn), lambda i: (0, i)),     # input slab tile
                pl.BlockSpec((32, E), lambda i: (0, 0)),     # w1^T (whole)
                pl.BlockSpec((32, 1), lambda i: (0, 0)),     # b1 as column
                pl.BlockSpec((32, 1), lambda i: (0, 0)),     # w2 as column
                pl.BlockSpec(memory_space=pltpu.MemorySpace.SMEM),  # b2 scalar
            ],
            out_specs=pl.BlockSpec((1, tn), lambda i: (0, i)),
        ),
        compiler_params=pltpu.CompilerParams(
            dimension_semantics=("parallel",)),
    )(x, w1t, b1c, w2c, b2s)

    # (1, N) -> (1, B, D) is a free row-major reshape (matches permute(2, 0, 1)).
    return out_flat.reshape(1, B, D)


def _reference(spacial_embeddings, w1, b1, w2, b2):
    x = jnp.transpose(spacial_embeddings, (1, 2, 0))          # (B, D, E)
    h = jnp.maximum(x @ w1 + b1, 0.0)                          # (B, D, 32)
    y = h @ w2 + b2                                            # (B, D, 1)
    y = y + x[:, :, 18:19]
    return jnp.transpose(y, (2, 0, 1))                         # (1, B, D)


if __name__ == "__main__":
    # Small shapes consistent with the module: embed_num >= 19 (index 18 used),
    # B*embed_dim = 256 so the output lane dim is a multiple of 128.
    embed_num, embed_dim, batch = 24, 64, 4

    key = jax.random.PRNGKey(0)
    k_x, k_w1, k_b1, k_w2, k_b2 = jax.random.split(key, 5)

    # fuse_layer params: Linear(embed_num, 32) -> ReLU -> Linear(32, 1).
    w1 = jax.random.normal(k_w1, (embed_num, 32), jnp.float32) * 0.1
    b1 = jax.random.normal(k_b1, (32,), jnp.float32) * 0.1
    w2 = jax.random.normal(k_w2, (32, 1), jnp.float32) * 0.1
    b2 = jax.random.normal(k_b2, (1,), jnp.float32) * 0.1

    se = jax.random.normal(k_x, (embed_num, batch, embed_dim), jnp.float32)

    out = spacial_embedding_fuse(se, w1, b1, w2, b2)
    out = jax.block_until_ready(out)

    ref = _reference(se, w1, b1, w2, b2)
    assert out.shape == (1, batch, embed_dim), out.shape
    assert jnp.allclose(out, ref, atol=1e-5, rtol=1e-5), float(jnp.max(jnp.abs(out - ref)))

    print("KERNEL_OK")
</pallas_src>

<mosaic_0001>
module attributes {stable_mosaic.version = 11 : i64} {
  func.func @_fuse_kernel(%arg0: i32, %arg1: memref<24x256xf32, #tpu.memory_space<vmem>>, %arg2: memref<32x24xf32, #tpu.memory_space<vmem>>, %arg3: memref<32x1xf32, #tpu.memory_space<vmem>>, %arg4: memref<32x1xf32, #tpu.memory_space<vmem>>, %arg5: memref<1xf32, #tpu.memory_space<smem>>, %arg6: memref<1x256xf32, #tpu.memory_space<vmem>>) attributes {dimension_semantics = [#tpu.dimension_semantics<parallel>], iteration_bounds = array<i64: 1>, scalar_prefetch = 0 : i64, scratch_operands = 0 : i64, tpu.core_type = #tpu.core_type<tc>, window_params = [{transform_indices = @transform_0, window_bounds = array<i64: 24, 256>}, {pipeline_mode = #tpu.pipeline_mode<synchronous>, transform_indices = @transform_1, window_bounds = array<i64: 32, 24>}, {pipeline_mode = #tpu.pipeline_mode<synchronous>, transform_indices = @transform_2, window_bounds = array<i64: 32, 1>}, {pipeline_mode = #tpu.pipeline_mode<synchronous>, transform_indices = @transform_3, window_bounds = array<i64: 32, 1>}, {transform_indices = @transform_4, window_bounds = array<i64: 1>}, {transform_indices = @transform_5, window_bounds = array<i64: 1, 256>}]} {
    %c0 = arith.constant 0 : index
    %c0_0 = arith.constant 0 : index
    %0 = vector.load %arg1[%c0, %c0_0] : memref<24x256xf32, #tpu.memory_space<vmem>>, vector<24x256xf32>
    %c0_1 = arith.constant 0 : index
    %c0_2 = arith.constant 0 : index
    %1 = vector.load %arg2[%c0_1, %c0_2] : memref<32x24xf32, #tpu.memory_space<vmem>>, vector<32x24xf32>
    %cst = arith.constant dense<0.000000e+00> : vector<32x256xf32>
    %2 = tpu.matmul %1, %0, %cst {dimension_numbers = #tpu.dot_dimension_numbers<[1], [0], [0], [1], [0, 0, 1, 1], [], []>} : vector<32x24xf32>, vector<24x256xf32>, vector<32x256xf32> -> vector<32x256xf32>
    %c0_3 = arith.constant 0 : index
    %c0_4 = arith.constant 0 : index
    %3 = vector.load %arg3[%c0_3, %c0_4] : memref<32x1xf32, #tpu.memory_space<vmem>>, vector<32x1xf32>
    %4 = vector.broadcast %3 : vector<32x1xf32> to vector<32x256xf32>
    %5 = arith.addf %2, %4 : vector<32x256xf32>
    %cst_5 = arith.constant 0.000000e+00 : f32
    %6 = vector.broadcast %cst_5 : f32 to vector<32x256xf32>
    %7 = arith.maximumf %5, %6 : vector<32x256xf32>
    %c0_6 = arith.constant 0 : index
    %c0_7 = arith.constant 0 : index
    %8 = vector.load %arg4[%c0_6, %c0_7] : memref<32x1xf32, #tpu.memory_space<vmem>>, vector<32x1xf32>
    %9 = vector.broadcast %8 : vector<32x1xf32> to vector<32x256xf32>
    %10 = arith.mulf %7, %9 : vector<32x256xf32>
    %cst_8 = arith.constant dense<0.000000e+00> : vector<256xf32>
    %11 = vector.multi_reduction <add>, %10, %cst_8 [0] : vector<32x256xf32> to vector<256xf32>
    %12 = vector.shape_cast %11 : vector<256xf32> to vector<1x256xf32>
    %c0_9 = arith.constant 0 : index
    %13 = memref.load %arg5[%c0_9] : memref<1xf32, #tpu.memory_space<smem>>
    %14 = vector.broadcast %13 : f32 to vector<1x256xf32>
    %15 = arith.addf %12, %14 : vector<1x256xf32>
    %16 = vector.extract_strided_slice %0 {offsets = [18, 0], sizes = [1, 256], strides = [1, 1]} : vector<24x256xf32> to vector<1x256xf32>
    %17 = arith.addf %15, %16 : vector<1x256xf32>
    %c0_10 = arith.constant 0 : index
    %c0_11 = arith.constant 0 : index
    %18 = vector.load %arg6[%c0_10, %c0_11] : memref<1x256xf32, #tpu.memory_space<vmem>>, vector<1x256xf32>
    tpu.vector_store %arg6[%c0_10, %c0_11], %17 {strides = array<i32>} : memref<1x256xf32, #tpu.memory_space<vmem>>, vector<1x256xf32>,
    return
  }
  func.func @transform_0(%arg0: i32) -> (i32, i32) {
    %c0_i32 = arith.constant 0 : i32
    %c0_i32_0 = arith.constant 0 : i32
    return %c0_i32, %arg0 : i32, i32
  }
  func.func @transform_1(%arg0: i32) -> (i32, i32) {
    %c0_i32 = arith.constant 0 : i32
    %c0_i32_0 = arith.constant 0 : i32
    %c0_i32_1 = arith.constant 0 : i32
    return %c0_i32, %c0_i32_0 : i32, i32
  }
  func.func @transform_2(%arg0: i32) -> (i32, i32) {
    %c0_i32 = arith.constant 0 : i32
    %c0_i32_0 = arith.constant 0 : i32
    %c0_i32_1 = arith.constant 0 : i32
    return %c0_i32, %c0_i32_0 : i32, i32
  }
  func.func @transform_3(%arg0: i32) -> (i32, i32) {
    %c0_i32 = arith.constant 0 : i32
    %c0_i32_0 = arith.constant 0 : i32
    %c0_i32_1 = arith.constant 0 : i32
    return %c0_i32, %c0_i32_0 : i32, i32
  }
  func.func @transform_4(%arg0: i32) -> i32 {
    %c0_i32 = arith.constant 0 : i32
    %c0_i32_0 = arith.constant 0 : i32
    return %c0_i32 : i32
  }
  func.func @transform_5(%arg0: i32) -> (i32, i32) {
    %c0_i32 = arith.constant 0 : i32
    %c0_i32_0 = arith.constant 0 : i32
    return %c0_i32, %arg0 : i32, i32
  }
}

</mosaic_0001>

<llo_original>
// kernel: tpu_custom_call.1
$region0: #{tpu_custom_call.1}
  #allocation0 [shape = 'u32[]', space=smem, size = 0x4, offset = 0x4, fixed_abs, tag = 'smem constant byte address 0x4 - core index']
  #allocation1 [shape = 'u32[144,128]{1,0:T(1,128)}', space=vmem, size = 0x12000, scoped, tag = 'internal scratch']
  #allocation2 [shape = 'f32[1]{0:T(128)S(6)}', space=smem, size = 0x200, scoped, tag = 'scoped memory for tpu_custom_call.1']
  %s0 = inlined_call_operand.vmem [shape: f32[24,256], index: 0, kind: input, shape index: {}]
  %s1 = inlined_call_operand.vmem [shape: f32[32,24], index: 1, kind: input, shape index: {}]
  %s2 = inlined_call_operand.vmem [shape: f32[32,1], index: 2, kind: input, shape index: {}]
  %s3 = inlined_call_operand.vmem [shape: f32[32,1], index: 3, kind: input, shape index: {}]
  %s4 = inlined_call_operand.<no memory space> [shape: f32[1], index: 4, kind: input, shape index: {}]
  %s5 = inlined_call_operand.hbm [shape: f32[1,256], index: 5, kind: output, shape index: {}]
  %s6 = sld [smem:[#allocation0]]
  $region30: #{tpu_custom_call.1} parent=0
    _
  %s8 = ssub.s32 1, %s6
  %s9 = scalar_select 0, %s8, %s6
  %10 = sst [smem:[#allocation2]] %s4
  $region1: #{tpu_custom_call.1} parent=0
    #allocation3 [shape = 'u8[1024]{0}', space=vmem, size = 0x400, scoped, tag = 'output window, operand 0, single buffered']
    #allocation4 [shape = 's32[1]{0}', space=sflag, size = 0x4, scoped, tag = 'scoped memory for tpu_custom_call.1']
    %11 = vsyncpa [#allocation4], 0
    // Predicated region
    $region2: #{tpu_custom_call.1} parent=1 // pred_check
      _
    $region3: #{tpu_custom_call.1} parent=1 // pred_check_branch
      %13 = sbr.rel (0) target = $region5
    $region4: #{tpu_custom_call.1} parent=1 // pred_region
      _
    $region5: #{tpu_custom_call.1} parent=1 // pred_fallthru
      _
    // Predicated region
    $region6: #{tpu_custom_call.1} parent=1 // pred_check
      _
    $region7: #{tpu_custom_call.1} parent=1 // pred_check_branch
      %15 = sbr.rel (0) target = $region9
    $region8: #{tpu_custom_call.1} parent=1 // pred_region
      _
    $region9: #{tpu_custom_call.1} parent=1 // pred_fallthru
      _
    // Predicated region
    $region10: #{tpu_custom_call.1} parent=1 // pred_check
      _
    $region11: #{tpu_custom_call.1} parent=1 // pred_check_branch
      %17 = sbr.rel (0) target = $region13
    $region12: #{tpu_custom_call.1} parent=1 // pred_region
      _
    $region13: #{tpu_custom_call.1} parent=1 // pred_fallthru
      _
    // Predicated region
    $region14: #{tpu_custom_call.1} parent=1 // pred_check
      _
    $region15: #{tpu_custom_call.1} parent=1 // pred_check_branch
      %19 = sbr.rel (0) target = $region17
    $region16: #{tpu_custom_call.1} parent=1 // pred_region
      _
    $region17: #{tpu_custom_call.1} parent=1 // pred_fallthru
      _
    // Predicated region
    $region18: #{tpu_custom_call.1} parent=1 // pred_check
      _
    $region19: #{tpu_custom_call.1} parent=1 // pred_check_branch
      %21 = sbr.rel (0) target = $region21
    $region20: #{tpu_custom_call.1} parent=1 // pred_region
      _
    $region21: #{tpu_custom_call.1} parent=1 // pred_fallthru
      _
    %v22 = vld [vmem:[%s0] sm:$0xff]
    %v23 = vld [vmem:[%s0 + $0x8] sm:$0xff]
    %v24 = vld [vmem:[%s0 + $0x10] sm:$0xff]
    %v25 = vld [vmem:[%s0 + $0x18] sm:$0xff]
    %v26 = vld [vmem:[%s0 + $0x20] sm:$0xff]
    %v27 = vld [vmem:[%s0 + $0x28] sm:$0xff]
    %v28 = vld [vmem:[%s1] sm:$0xff]
    %v29 = vld [vmem:[%s1 + $0x8] sm:$0xff]
    %v30 = vld [vmem:[%s1 + $0x10] sm:$0xff]
    %v31 = vld [vmem:[%s1 + $0x18] sm:$0xff]
    %v32 = vld [vmem:[%s2] sm:$0xff]
    %v33 = vld [vmem:[%s2 + $0x8] sm:$0xff]
    %v34 = vld [vmem:[%s2 + $0x10] sm:$0xff]
    %v35 = vld [vmem:[%s2 + $0x18] sm:$0xff]
    %37 = vset.pattern.permute.xlu0 0
    %38 = vperm.xlu0 %37, %v32
    %v39 = vpop.permute.xlu0 %38
    %42 = vset.pattern.permute.xlu0 0
    %43 = vperm.xlu0 %42, %v33
    %v44 = vpop.permute.xlu0 %43
    %47 = vset.pattern.permute.xlu0 0
    %48 = vperm.xlu0 %47, %v34
    %v49 = vpop.permute.xlu0 %48
    %52 = vset.pattern.permute.xlu0 0
    %53 = vperm.xlu0 %52, %v35
    %v54 = vpop.permute.xlu0 %53
    %vm56 = vcmask 195584
    %v58 = vsel %vm56, %v28, 0
    %v61 = vsel %vm56, %v29, 0
    %v64 = vsel %vm56, %v30, 0
    %v67 = vsel %vm56, %v31, 0
    %69 = vmatprep.subr.mxu0 %v23
    %70 = vmatpush1.msra.mxu0 %v22
    %71 = vmatprep.subr.mxu0 %v25
    %72 = vmatpush1.msra.mxu0 %v24
    %73 = vmatprep.subr.mxu0 %v27
    %74 = vmatpush1.msra.mxu0 %v26
    %75 = vmatprep.subr.mxu0 0.0
    %76 = vmatpush1.msra.mxu0 0.0
    %77 = vmatprep.subr.mxu0 0.0
    %78 = vmatpush1.msra.mxu0 0.0
    %79 = vmatprep.subr.mxu0 0.0
    %80 = vmatpush1.msra.mxu0 0.0
    %81 = vmatprep.subr.mxu0 0.0
    %82 = vmatpush1.msra.mxu0 0.0
    %83 = vmatprep.subr.mxu0 0.0
    %84 = vmatpush1.msra.mxu0 0.0
    %85 = vmatprep.subr.mxu0 0.0
    %86 = vmatpush1.msra.mxu0 0.0
    %87 = vmatprep.subr.mxu0 0.0
    %88 = vmatpush1.msra.mxu0 0.0
    %89 = vmatprep.subr.mxu0 0.0
    %90 = vmatpush1.msra.mxu0 0.0
    %91 = vmatprep.subr.mxu0 0.0
    %92 = vmatpush1.msra.mxu0 0.0
    %93 = vmatprep.subr.mxu0 0.0
    %94 = vmatpush1.msra.mxu0 0.0
    %95 = vmatprep.subr.mxu0 0.0
    %96 = vmatpush1.msra.mxu0 0.0
    %97 = vmatprep.subr.mxu0 0.0
    %98 = vmatpush1.msra.mxu0 0.0
    %99 = vmatprep.subr.mxu0 0.0
    %100 = vmatpush1.msra.mxu0 0.0
    %101 = vmatprep.subr.mxu0 0.0
    %102 = vmatpush1.msra.mxu0 0.0
    %103 = vmatprep.subr.mxu0 0.0
    %104 = vmatpush1.msra.mxu0 0.0
    %105 = vmatprep.subr.mxu0 0.0
    %106 = vmatpush1.msra.mxu0 0.0
    %107 = vmatprep.subr.mxu0 0.0
    %108 = vmatpush1.msra.mxu0 0.0
    %109 = vmatprep.subr.mxu0 0.0
    %110 = vmatpush1.msra.mxu0 0.0
    %111 = vmatprep.subr.mxu0 0.0
    %112 = vmatpush1.msra.mxu0 0.0
    %113 = vmatprep.subr.mxu0 0.0
    %114 = vmatpush1.msra.mxu0 0.0
    %115 = vmatprep.subr.mxu0 0.0
    %116 = vmatpush1.msra.mxu0 0.0
    %117 = vmatprep.subr.mxu0 0.0
    %118 = vmatpush1.msra.mxu0 0.0
    %119 = vmatprep.subr.mxu0 0.0
    %120 = vmatpush1.msra.mxu0 0.0
    %121 = vmatprep.subr.mxu0 0.0
    %122 = vmatpush1.msra.mxu0 0.0
    %123 = vmatprep.subr.mxu0 0.0
    %124 = vmatpush1.msra.mxu0 0.0
    %125 = vmatprep.subr.mxu0 0.0
    %126 = vmatpush1.msra.mxu0 0.0
    %127 = vmatprep.subr.mxu0 0.0
    %128 = vmatpush1.msra.mxu0 0.0
    %129 = vmatprep.subr.mxu0 0.0
    %130 = vmatpush1.msra.mxu0 0.0
    %131 = vmatprep.subr.mxu0 0.0
    %132 = vmatpush1.msra.mxu0 0.0
    %133 = vmatprep.mubr.f32.mxu0 0.0
    %134 = vmatmul.mubr.f32.gmra.mrb[0].mxu0 %v58
    %v135 = vpop.f32.mrb[0].mxu0
    %v136 = vadd.f32 %v39, %v135
    %v137 = vpop.f32.mrb[0].mxu0
    %v138 = vadd.f32 %v39, %v137
    %139 = vmatprep.mubr.f32.mxu0 0.0
    %140 = vmatmul.mubr.f32.gmra.mrb[0].mxu0 %v61
    %v141 = vpop.f32.mrb[0].mxu0
    %v142 = vadd.f32 %v44, %v141
    %v143 = vpop.f32.mrb[0].mxu0
    %v144 = vadd.f32 %v44, %v143
    %145 = vmatprep.mubr.f32.mxu0 0.0
    %146 = vmatmul.mubr.f32.gmra.mrb[0].mxu0 %v64
    %v147 = vpop.f32.mrb[0].mxu0
    %v148 = vadd.f32 %v49, %v147
    %v149 = vpop.f32.mrb[0].mxu0
    %v150 = vadd.f32 %v49, %v149
    %151 = vmatprep.mubr.f32.mxu0 0.0
    %152 = vmatmul.mubr.f32.gmra.mrb[0].mxu0 %v67
    %v153 = vpop.f32.mrb[0].mxu0
    %v154 = vadd.f32 %v54, %v153
    %v155 = vpop.f32.mrb[0].mxu0
    %v156 = vadd.f32 %v54, %v155
    %157 = vdwg.mxu0
    %v158 = vmax.f32 %v136, 0.0
    %v159 = vmax.f32 %v138, 0.0
    %v160 = vmax.f32 %v142, 0.0
    %v161 = vmax.f32 %v144, 0.0
    %v162 = vmax.f32 %v148, 0.0
    %v163 = vmax.f32 %v150, 0.0
    %v164 = vmax.f32 %v154, 0.0
    %v165 = vmax.f32 %v156, 0.0
    %v166 = vld [vmem:[%s3] sm:$0xff]
    %v167 = vld [vmem:[%s3 + $0x8] sm:$0xff]
    %v168 = vld [vmem:[%s3 + $0x10] sm:$0xff]
    %v169 = vld [vmem:[%s3 + $0x18] sm:$0xff]
    %171 = vset.pattern.permute.xlu0 0
    %172 = vperm.xlu0 %171, %v166
    %v173 = vpop.permute.xlu0 %172
    %176 = vset.pattern.permute.xlu0 0
    %177 = vperm.xlu0 %176, %v167
    %v178 = vpop.permute.xlu0 %177
    %181 = vset.pattern.permute.xlu0 0
    %182 = vperm.xlu0 %181, %v168
    %v183 = vpop.permute.xlu0 %182
    %186 = vset.pattern.permute.xlu0 0
    %187 = vperm.xlu0 %186, %v169
    %v188 = vpop.permute.xlu0 %187
    %v190 = vmul.f32 %v158, %v173
    %v191 = vmul.f32 %v159, %v173
    %v192 = vmul.f32 %v160, %v178
    %v193 = vmul.f32 %v161, %v178
    %v194 = vmul.f32 %v162, %v183
    %v195 = vmul.f32 %v163, %v183
    %v196 = vmul.f32 %v164, %v188
    %v197 = vmul.f32 %v165, %v188
    %v198 = vadd.f32 %v190, %v192
    %v199 = vadd.f32 %v198, %v194
    %v200 = vadd.f32 %v199, %v196
    %v201 = vrot.slane %v200, 4
    %v202 = vadd.f32 %v200, %v201
    %v203 = vrot.slane %v202, 2
    %v204 = vadd.f32 %v202, %v203
    %v205 = vrot.slane %v204, 1
    %v206 = vadd.f32 %v204, %v205
    %v207 = vadd.f32 %v191, %v193
    %v208 = vadd.f32 %v207, %v195
    %v209 = vadd.f32 %v208, %v197
    %v210 = vrot.slane %v209, 4
    %v211 = vadd.f32 %v209, %v210
    %v212 = vrot.slane %v211, 2
    %v213 = vadd.f32 %v211, %v212
    %v214 = vrot.slane %v213, 1
    %v215 = vadd.f32 %v213, %v214
    %s216 = sld [smem:[#allocation2]]
    %v217 = vstv %s216
    %v218 = vadd.f32 %v206, %v217
    %v219 = vadd.f32 %v215, %v217
    %v220 = vadd.f32 %v218, %v26
    %v221 = vadd.f32 %v219, %v27
    %v224 = vcombine.low %v220, %v221
    %v226 = vunpack.c.l.s4 1966171168
    %v227 = vunpack.c.0.s8 %v226
    %v228 = vlaneseq
    %v229 = vshrl.u32 %v228, 7
    %v230 = vsub.s32 %v227, %v229
    %v231 = vrot.slane %v224, %v230
    %v233 = vunpack.c.l.s4 1966171168
    %v234 = vunpack.c.0.s8 %v233
    %v235 = vlaneseq
    %v236 = vshrl.u32 %v235, 7
    %v237 = vsub.s32 %v234, %v236
    %v238 = vrot.slane %v231, %v237
    %v239 = vcombine.high %v238, %v238
    %v241 = vlaneseq
    %vm242 = vcmp.ge.s32.totalorder %v241, 0
    %vm243 = vcmp.lt.s32.totalorder %v241, 256
    %vm244 = vmand %vm242, %vm243
    %245 = vst.msk [vmem:[#allocation3] sm:$0x3] %vm244, %v239
    // Predicated region
    $region22: #{tpu_custom_call.1} parent=1 // pred_check
      _
    $region23: #{tpu_custom_call.1} parent=1 // pred_check_branch
      %247 = sbr.rel (0) target = $region25
    $region24: #{tpu_custom_call.1} parent=1 // pred_region
      %s249 = ssub.s32 32, 32
      %250 = vsyncadd [#allocation4], %s249
      %s252 = sshll.u32 [#allocation3], 4
      %s253 = int_to_ptr.vmem [resolvable:$true] %s252
      %255 = dma.vmem_to_hbm [thread:$0]  %s253, 32, %s5, [#allocation4]
    $region25: #{tpu_custom_call.1} parent=1 // pred_fallthru
      _
    // Predicated region
    $region26: #{tpu_custom_call.1} parent=1 // pred_check
      _
    $region27: #{tpu_custom_call.1} parent=1 // pred_check_branch
      %257 = sbr.rel (0) target = $region29
    $region28: #{tpu_custom_call.1} parent=1 // pred_region
      %258 = dma.done [#allocation4], 32
    $region29: #{tpu_custom_call.1} parent=1 // pred_fallthru
      _
    %259 = vsyncpa [#allocation4], 1

</llo_original>
